<compile_context>
chip_gen: v7x
topology: tpu7x:2x2x1
jax: 0.10.0
libtpu: 0.0.40
codegen_flags: <defaults>
</compile_context>

<pallas_src>
import math
import functools

import jax
import jax.numpy as jnp
from jax.experimental import pallas as pl
from jax.experimental.pallas import tpu as pltpu

_MIB = 1024 * 1024


def _round_up(x, m):
    return ((x + m - 1) // m) * m


def _vmem_limits():
    """Per-generation (tile_budget_bytes, vmem_limit_bytes)."""
    cap = None
    try:
        cap = int(pltpu.get_tpu_info().vmem_capacity_bytes)
    except Exception:
        cap = None
    if not cap or cap <= 0:
        cap = 64 * _MIB            # conservative fallback: v7x has 64 MiB / TC
    limit = max(32 * _MIB, min((cap * 3) // 4, 100 * _MIB))
    budget = (limit * 7) // 10
    return budget, limit


def _choose_tb_packed(bt, l_p, lo_p, ks, budget):
    """Slices per grid step for the packed path (VMEM-accounted)."""
    resident = 4 * 2 * (2 * l_p * l_p + ks * l_p * lo_p + lo_p)   # gso, 2gso, w, b (x2 bufs)
    per_slice = 4 * (5 * l_p + 4 * lo_p)      # x block(x2) + 3 live terms, acc + out(x2)
    avail = max(budget - resident, per_slice * 8)
    tb = max(1, min(avail // per_slice, 1024))
    if bt >= 16:
        tb = min(tb, bt // 2)                  # >= 2 grid steps so both v7x TCs work
    tb = min(tb, bt)
    if bt >= 8:
        tb = max(8, (tb // 8) * 8)             # sublane-aligned slice blocks
    else:
        tb = bt                                # block == full dim is always legal
    return int(tb)


def _choose_tb_general(bt, c_in_p, n_p, c_out, ks, budget):
    """Slices per grid step for the general path (VMEM-accounted, lane-padded)."""
    n_l = _round_up(n_p, 128)
    ci_l = _round_up(c_in_p, 128)
    co_l = _round_up(c_out, 128)
    resident = 4 * 2 * (2 * n_l * n_l + ks * c_in_p * co_l + co_l)
    per_slice = 4 * (5 * c_in_p * n_l          # x block(x2) + 3 live Chebyshev terms
                     + n_p * ci_l              # pivoted slab (one live at a time)
                     + 3 * n_p * co_l)         # accumulator + out block(x2)
    avail = max(budget - resident, per_slice)
    tb = max(1, min(avail // per_slice, 2048))
    if bt >= 16:
        tb = min(tb, bt // 2)
    return int(max(1, min(tb, bt)))


# ----------------------------------------------------------------------------
# Kernels
# ----------------------------------------------------------------------------

def _cheb_kernel_packed(x_ref, g_ref, g2_ref, w_ref, b_ref, o_ref, *, Ks, use_bias):
    """Lane-packed path.

    x_ref : (tb, Lp)        rows = (b,t) slice, lanes = (channel, node)
    g_ref : (Lp, Lp)        block-diag gso^T (per channel)
    g2_ref: (Lp, Lp)        2 * g_ref
    w_ref : (Ks, Lp, LoP)   per-order weights, lanes = (node, c_out)
    b_ref : (1, LoP)        bias tiled over nodes
    o_ref : (tb, LoP)
    """
    f32 = jnp.float32
    x0 = x_ref[...]
    acc = jnp.dot(x0, w_ref[0], preferred_element_type=f32)
    if Ks >= 2:
        x1 = jnp.dot(x0, g_ref[...], preferred_element_type=f32)
        acc = acc + jnp.dot(x1, w_ref[1], preferred_element_type=f32)
        xkm2, xkm1 = x0, x1
        for k in range(2, Ks):
            xk = jnp.dot(xkm1, g2_ref[...], preferred_element_type=f32) - xkm2
            acc = acc + jnp.dot(xk, w_ref[k], preferred_element_type=f32)
            xkm2, xkm1 = xkm1, xk
    if use_bias:
        acc = acc + b_ref[...]
    o_ref[...] = acc.astype(o_ref.dtype)


def _cheb_kernel_general(x_ref, gso_t_ref, gso2_t_ref, w_ref, b_ref, o_ref, *,
                         tb, c_in_p, n_p, Ks, use_bias):
    """General path.

    x_ref     : (tb*c_in_p, n_p)   rows = (slice, channel), lanes = node
    gso_t_ref : (n_p, n_p)         gso^T (propagation = X @ gso^T)
    gso2_t_ref: (n_p, n_p)         2 * gso^T
    w_ref     : (Ks, c_in_p, c_out)
    b_ref     : (1, c_out)
    o_ref     : (tb*n_p, c_out)    rows = (slice, node)
    """
    f32 = jnp.float32

    def pivot(xk):
        # rows (slice, channel)/lanes node -> rows (slice, node)/lanes channel;
        # c_in_p and n_p are multiples of 8, so the reshapes are aligned
        # leading-dim splits/merges and the transpose is a clean batched
        # last-two-dims (XLU) transpose, interleaved with the next MXU matmul.
        xk3 = xk.reshape(tb, c_in_p, n_p)
        return jnp.transpose(xk3, (0, 2, 1)).reshape(tb * n_p, c_in_p)

    x0 = x_ref[...]
    acc = jnp.dot(pivot(x0), w_ref[0], preferred_element_type=f32)
    if Ks >= 2:
        x1 = jnp.dot(x0, gso_t_ref[...], preferred_element_type=f32)
        acc = acc + jnp.dot(pivot(x1), w_ref[1], preferred_element_type=f32)
        xkm2, xkm1 = x0, x1
        for k in range(2, Ks):
            xk = jnp.dot(xkm1, gso2_t_ref[...], preferred_element_type=f32) - xkm2
            acc = acc + jnp.dot(pivot(xk), w_ref[k], preferred_element_type=f32)
            xkm2, xkm1 = xkm1, xk
    if use_bias:
        acc = acc + b_ref[...]
    o_ref[...] = acc.astype(o_ref.dtype)


# ----------------------------------------------------------------------------
# Wrappers
# ----------------------------------------------------------------------------

def _forward_packed(x, gso, weight, bias_arr, use_bias, L, L_p, Lo, Lo_p,
                    budget, vmem_limit):
    B, c_in, T, N = x.shape
    Ks, _, c_out = weight.shape
    BT = B * T
    f32 = jnp.float32
    tb = _choose_tb_packed(BT, L_p, Lo_p, Ks, budget)

    # Lane-packed activations: rows = (b,t) slice, lanes = (channel, node).
    xp = jnp.transpose(x, (0, 2, 1, 3)).reshape(BT, L)
    xp = jnp.pad(xp, ((0, 0), (0, L_p - L)))
    # Block-diagonal propagation operator (one gso^T block per channel) and the
    # pre-doubled variant used for Chebyshev orders k >= 2.
    g_blk = jnp.pad(jnp.kron(jnp.eye(c_in, dtype=f32), gso.T),
                    ((0, L_p - L), (0, L_p - L)))
    g2_blk = 2.0 * g_blk
    # Per-order weights expanded so the product's lanes are (node, c_out).
    w_blk = jnp.einsum("kic,nm->kinmc", weight,
                       jnp.eye(N, dtype=f32)).reshape(Ks, L, Lo)
    w_blk = jnp.pad(w_blk, ((0, 0), (0, L_p - L), (0, Lo_p - Lo)))
    b_pack = jnp.pad(jnp.tile(bias_arr, N), (0, Lo_p - Lo)).reshape(1, Lo_p)

    grid = (pl.cdiv(BT, tb),)
    flops = 2 * BT * ((Ks - 1) * L_p * L_p + Ks * L_p * Lo_p)
    bytes_accessed = 4 * (xp.size + BT * Lo_p + g_blk.size + g2_blk.size
                          + w_blk.size + b_pack.size)
    kernel = functools.partial(_cheb_kernel_packed, Ks=Ks, use_bias=use_bias)

    out = pl.pallas_call(
        kernel,
        out_shape=jax.ShapeDtypeStruct((BT, Lo_p), f32),
        grid_spec=pltpu.PrefetchScalarGridSpec(
            num_scalar_prefetch=0,
            grid=grid,
            in_specs=[
                pl.BlockSpec((tb, L_p), lambda i: (i, 0)),          # x tile
                pl.BlockSpec((L_p, L_p), lambda i: (0, 0)),         # gso_blk (resident)
                pl.BlockSpec((L_p, L_p), lambda i: (0, 0)),         # 2*gso_blk
                pl.BlockSpec((Ks, L_p, Lo_p), lambda i: (0, 0, 0)),  # weights
                pl.BlockSpec((1, Lo_p), lambda i: (0, 0)),           # bias
            ],
            out_specs=pl.BlockSpec((tb, Lo_p), lambda i: (i, 0)),
        ),
        compiler_params=pltpu.CompilerParams(
            dimension_semantics=("parallel",),
            vmem_limit_bytes=int(vmem_limit),
        ),
        cost_estimate=pl.CostEstimate(flops=int(flops), transcendentals=0,
                                      bytes_accessed=int(bytes_accessed)),
    )(xp, g_blk, g2_blk, w_blk, b_pack)
    return out[:, :Lo].reshape(B, T, N, c_out)


def _forward_general(x, gso, weight, bias_arr, use_bias, budget, vmem_limit):
    B, c_in, T, N = x.shape
    Ks, _, c_out = weight.shape
    BT = B * T
    f32 = jnp.float32
    c_in_p = _round_up(c_in, 8)
    if N % 128 == 0:
        n_p = N
    elif N > 128 and _round_up(N, 128) * 4 <= 5 * N:
        n_p = _round_up(N, 128)          # lane-dense vregs when pad waste <= 25%
    else:
        n_p = _round_up(N, 8)
    tb = _choose_tb_general(BT, c_in_p, n_p, c_out, Ks, budget)

    # (B, c_in, T, N) -> (B*T, c_in_p, n_p): moves whole N-contiguous rows.
    xr = jnp.transpose(x, (0, 2, 1, 3))
    xr = jnp.pad(xr, ((0, 0), (0, 0), (0, c_in_p - c_in), (0, n_p - N)))
    x_flat = xr.reshape(BT * c_in_p, n_p)

    gso_t = jnp.pad(gso.T, ((0, n_p - N), (0, n_p - N)))
    gso2_t = 2.0 * gso_t
    w3 = jnp.pad(weight, ((0, 0), (0, c_in_p - c_in), (0, 0)))
    b2 = bias_arr.reshape(1, c_out)

    grid = (pl.cdiv(BT, tb),)
    flops = 2 * BT * ((Ks - 1) * c_in_p * n_p * n_p + Ks * n_p * c_in_p * c_out)
    bytes_accessed = 4 * (x_flat.size + BT * n_p * c_out + 2 * gso_t.size
                          + w3.size + b2.size)
    kernel = functools.partial(_cheb_kernel_general, tb=tb, c_in_p=c_in_p,
                               n_p=n_p, Ks=Ks, use_bias=use_bias)

    out = pl.pallas_call(
        kernel,
        out_shape=jax.ShapeDtypeStruct((BT * n_p, c_out), f32),
        grid_spec=pltpu.PrefetchScalarGridSpec(
            num_scalar_prefetch=0,
            grid=grid,
            in_specs=[
                pl.BlockSpec((tb * c_in_p, n_p), lambda i: (i, 0)),   # x tile
                pl.BlockSpec((n_p, n_p), lambda i: (0, 0)),           # gso^T (resident)
                pl.BlockSpec((n_p, n_p), lambda i: (0, 0)),           # 2*gso^T
                pl.BlockSpec((Ks, c_in_p, c_out), lambda i: (0, 0, 0)),  # weights
                pl.BlockSpec((1, c_out), lambda i: (0, 0)),           # bias
            ],
            out_specs=pl.BlockSpec((tb * n_p, c_out), lambda i: (i, 0)),
        ),
        compiler_params=pltpu.CompilerParams(
            dimension_semantics=("parallel",),
            vmem_limit_bytes=int(vmem_limit),
        ),
        cost_estimate=pl.CostEstimate(flops=int(flops), transcendentals=0,
                                      bytes_accessed=int(bytes_accessed)),
    )(x_flat, gso_t, gso2_t, w3, b2)
    out = out.reshape(BT, n_p, c_out)[:, :N, :]
    return out.reshape(B, T, N, c_out)


def cheb_graph_conv(x, gso, weight, bias=None):
    """ChebGraphConv forward.

    x      : (B, c_in, T, N) float32
    gso    : (N, N)          float32
    weight : (Ks, c_in, c_out) float32
    bias   : (c_out,) float32 or None
    returns: (B, T, N, c_out) float32 (channel-last, like the PyTorch module)
    """
    B, c_in, T, N = x.shape
    Ks, c_in_w, c_out = weight.shape
    if Ks < 1:
        raise ValueError(f"Ks must be a positive integer, got {Ks}.")
    if c_in_w != c_in:
        raise ValueError(f"weight c_in {c_in_w} != input c_in {c_in}.")

    f32 = jnp.float32
    x = x.astype(f32)
    gso = gso.astype(f32)
    weight = weight.astype(f32)
    use_bias = bias is not None
    bias_arr = bias.astype(f32) if use_bias else jnp.zeros((c_out,), f32)
    budget, vmem_limit = _vmem_limits()

    L, Lo = c_in * N, N * c_out
    L_p, Lo_p = _round_up(L, 128), _round_up(Lo, 128)
    packed_resident = 4 * (2 * L_p * L_p + Ks * L_p * Lo_p + Lo_p)
    use_packed = (L_p <= 512) and (Lo_p <= 4096) and (packed_resident <= 8 * _MIB)

    if use_packed:
        return _forward_packed(x, gso, weight, bias_arr, use_bias,
                               L, L_p, Lo, Lo_p, budget, vmem_limit)
    return _forward_general(x, gso, weight, bias_arr, use_bias, budget, vmem_limit)


def cheb_graph_conv_ref(x_nchw, gso, weight, bias=None):
    """Pure-JAX reference mirroring the PyTorch forward exactly."""
    x = jnp.transpose(x_nchw, (0, 2, 3, 1))            # (B, T, N, c_in)
    Ks = weight.shape[0]
    x_list = [x]
    if Ks >= 2:
        x_list.append(jnp.einsum("hi,btij->bthj", gso, x))
        for k in range(2, Ks):
            x_list.append(jnp.einsum("hi,btij->bthj", 2.0 * gso, x_list[k - 1])
                          - x_list[k - 2])
    xs = jnp.stack(x_list, axis=2)                      # (B, T, Ks, N, c_in)
    out = jnp.einsum("btkhi,kij->bthj", xs, weight)     # (B, T, N, c_out)
    if bias is not None:
        out = out + bias
    return out


if __name__ == "__main__":
    def run_case(case_key, B, c_in, T, N, c_out, Ks, use_bias=True):
        kx, kg, kw, kb = jax.random.split(case_key, 4)
        x = jax.random.normal(kx, (B, c_in, T, N), dtype=jnp.float32)

        # Deterministic symmetric, row-normalized graph shift operator.
        a = jax.random.uniform(kg, (N, N), dtype=jnp.float32)
        a = 0.5 * (a + a.T)
        gso = a / jnp.sum(a, axis=1, keepdims=True)

        # Parameter init mimicking reset_parameters (kaiming_uniform a=sqrt(5)).
        fan_in = c_in * c_out
        bound = 1.0 / math.sqrt(fan_in)
        weight = jax.random.uniform(kw, (Ks, c_in, c_out), dtype=jnp.float32,
                                    minval=-bound, maxval=bound)
        bias = (jax.random.uniform(kb, (c_out,), dtype=jnp.float32,
                                   minval=-bound, maxval=bound)
                if use_bias else None)

        out = jax.block_until_ready(jax.jit(cheb_graph_conv)(x, gso, weight, bias))
        ref = cheb_graph_conv_ref(x, gso, weight, bias)
        if out.shape != (B, T, N, c_out):
            raise AssertionError(f"bad output shape {out.shape}")
        err = float(jnp.max(jnp.abs(out - ref)))
        if not jnp.allclose(out, ref, atol=5e-4, rtol=5e-4):
            raise AssertionError(f"mismatch vs reference: max abs err = {err}")

    key = jax.random.PRNGKey(0)
    k1, k2, k3 = jax.random.split(key, 3)

    # Primary small configuration (packed lane-dense path, 2-step grid).
    run_case(k1, B=2, c_in=4, T=8, N=16, c_out=32, Ks=3, use_bias=True)
    # Unaligned channels / nodes, no bias, Ks=2 (packed path, single block).
    run_case(k2, B=1, c_in=3, T=5, N=13, c_out=16, Ks=2, use_bias=False)
    # Larger graph -> general path (fat Chebyshev matmuls + streamed pivot),
    # 3-step grid with a clipped partial last block and channel padding.
    run_case(k3, B=3, c_in=6, T=7, N=128, c_out=24, Ks=4, use_bias=True)

    print("KERNEL_OK")
</pallas_src>

<mosaic_0001>
module attributes {stable_mosaic.version = 11 : i64} {
  func.func @_cheb_kernel_packed(%arg0: i32, %arg1: memref<8x128xf32, #tpu.memory_space<vmem>>, %arg2: memref<128x128xf32, #tpu.memory_space<vmem>>, %arg3: memref<128x128xf32, #tpu.memory_space<vmem>>, %arg4: memref<3x128x512xf32, #tpu.memory_space<vmem>>, %arg5: memref<1x512xf32, #tpu.memory_space<vmem>>, %arg6: memref<8x512xf32, #tpu.memory_space<vmem>>) attributes {dimension_semantics = [#tpu.dimension_semantics<parallel>], iteration_bounds = array<i64: 2>, scalar_prefetch = 0 : i64, scratch_operands = 0 : i64, tpu.core_type = #tpu.core_type<tc>, window_params = [{transform_indices = @transform_0, window_bounds = array<i64: 8, 128>}, {pipeline_mode = #tpu.pipeline_mode<synchronous>, transform_indices = @transform_1, window_bounds = array<i64: 128, 128>}, {pipeline_mode = #tpu.pipeline_mode<synchronous>, transform_indices = @transform_2, window_bounds = array<i64: 128, 128>}, {pipeline_mode = #tpu.pipeline_mode<synchronous>, transform_indices = @transform_3, window_bounds = array<i64: 3, 128, 512>}, {pipeline_mode = #tpu.pipeline_mode<synchronous>, transform_indices = @transform_4, window_bounds = array<i64: 1, 512>}, {transform_indices = @transform_5, window_bounds = array<i64: 8, 512>}]} {
    %c0 = arith.constant 0 : index
    %c0_0 = arith.constant 0 : index
    %0 = vector.load %arg1[%c0, %c0_0] : memref<8x128xf32, #tpu.memory_space<vmem>>, vector<8x128xf32>
    %c0_1 = arith.constant 0 : index
    %c0_2 = arith.constant 0 : index
    %c0_3 = arith.constant 0 : index
    %1 = vector.load %arg4[%c0_1, %c0_2, %c0_3] : memref<3x128x512xf32, #tpu.memory_space<vmem>>, vector<1x128x512xf32>
    %2 = vector.shape_cast %1 : vector<1x128x512xf32> to vector<128x512xf32>
    %cst = arith.constant dense<0.000000e+00> : vector<8x512xf32>
    %3 = tpu.matmul %0, %2, %cst {dimension_numbers = #tpu.dot_dimension_numbers<[1], [0], [0], [1], [0, 0, 1, 1], [], []>} : vector<8x128xf32>, vector<128x512xf32>, vector<8x512xf32> -> vector<8x512xf32>
    %c0_4 = arith.constant 0 : index
    %c0_5 = arith.constant 0 : index
    %4 = vector.load %arg2[%c0_4, %c0_5] : memref<128x128xf32, #tpu.memory_space<vmem>>, vector<128x128xf32>
    %cst_6 = arith.constant dense<0.000000e+00> : vector<8x128xf32>
    %5 = tpu.matmul %0, %4, %cst_6 {dimension_numbers = #tpu.dot_dimension_numbers<[1], [0], [0], [1], [0, 0, 1, 1], [], []>} : vector<8x128xf32>, vector<128x128xf32>, vector<8x128xf32> -> vector<8x128xf32>
    %c1 = arith.constant 1 : index
    %c0_7 = arith.constant 0 : index
    %c0_8 = arith.constant 0 : index
    %6 = vector.load %arg4[%c1, %c0_7, %c0_8] : memref<3x128x512xf32, #tpu.memory_space<vmem>>, vector<1x128x512xf32>
    %7 = vector.shape_cast %6 : vector<1x128x512xf32> to vector<128x512xf32>
    %cst_9 = arith.constant dense<0.000000e+00> : vector<8x512xf32>
    %8 = tpu.matmul %5, %7, %cst_9 {dimension_numbers = #tpu.dot_dimension_numbers<[1], [0], [0], [1], [0, 0, 1, 1], [], []>} : vector<8x128xf32>, vector<128x512xf32>, vector<8x512xf32> -> vector<8x512xf32>
    %9 = arith.addf %3, %8 : vector<8x512xf32>
    %c0_10 = arith.constant 0 : index
    %c0_11 = arith.constant 0 : index
    %10 = vector.load %arg3[%c0_10, %c0_11] : memref<128x128xf32, #tpu.memory_space<vmem>>, vector<128x128xf32>
    %cst_12 = arith.constant dense<0.000000e+00> : vector<8x128xf32>
    %11 = tpu.matmul %5, %10, %cst_12 {dimension_numbers = #tpu.dot_dimension_numbers<[1], [0], [0], [1], [0, 0, 1, 1], [], []>} : vector<8x128xf32>, vector<128x128xf32>, vector<8x128xf32> -> vector<8x128xf32>
    %12 = arith.subf %11, %0 : vector<8x128xf32>
    %c2 = arith.constant 2 : index
    %c0_13 = arith.constant 0 : index
    %c0_14 = arith.constant 0 : index
    %13 = vector.load %arg4[%c2, %c0_13, %c0_14] : memref<3x128x512xf32, #tpu.memory_space<vmem>>, vector<1x128x512xf32>
    %14 = vector.shape_cast %13 : vector<1x128x512xf32> to vector<128x512xf32>
    %cst_15 = arith.constant dense<0.000000e+00> : vector<8x512xf32>
    %15 = tpu.matmul %12, %14, %cst_15 {dimension_numbers = #tpu.dot_dimension_numbers<[1], [0], [0], [1], [0, 0, 1, 1], [], []>} : vector<8x128xf32>, vector<128x512xf32>, vector<8x512xf32> -> vector<8x512xf32>
    %16 = arith.addf %9, %15 : vector<8x512xf32>
    %c0_16 = arith.constant 0 : index
    %c0_17 = arith.constant 0 : index
    %17 = vector.load %arg5[%c0_16, %c0_17] : memref<1x512xf32, #tpu.memory_space<vmem>>, vector<1x512xf32>
    %18 = vector.broadcast %17 : vector<1x512xf32> to vector<8x512xf32>
    %19 = arith.addf %16, %18 : vector<8x512xf32>
    %c0_18 = arith.constant 0 : index
    %c0_19 = arith.constant 0 : index
    %20 = vector.load %arg6[%c0_18, %c0_19] : memref<8x512xf32, #tpu.memory_space<vmem>>, vector<8x512xf32>
    tpu.vector_store %arg6[%c0_18, %c0_19], %19 {strides = array<i32>} : memref<8x512xf32, #tpu.memory_space<vmem>>, vector<8x512xf32>,
    return
  }
  func.func @transform_0(%arg0: i32) -> (i32, i32) {
    %c0_i32 = arith.constant 0 : i32
    %c0_i32_0 = arith.constant 0 : i32
    return %arg0, %c0_i32 : i32, i32
  }
  func.func @transform_1(%arg0: i32) -> (i32, i32) {
    %c0_i32 = arith.constant 0 : i32
    %c0_i32_0 = arith.constant 0 : i32
    %c0_i32_1 = arith.constant 0 : i32
    return %c0_i32, %c0_i32_0 : i32, i32
  }
  func.func @transform_2(%arg0: i32) -> (i32, i32) {
    %c0_i32 = arith.constant 0 : i32
    %c0_i32_0 = arith.constant 0 : i32
    %c0_i32_1 = arith.constant 0 : i32
    return %c0_i32, %c0_i32_0 : i32, i32
  }
  func.func @transform_3(%arg0: i32) -> (i32, i32, i32) {
    %c0_i32 = arith.constant 0 : i32
    %c0_i32_0 = arith.constant 0 : i32
    %c0_i32_1 = arith.constant 0 : i32
    %c0_i32_2 = arith.constant 0 : i32
    return %c0_i32, %c0_i32_0, %c0_i32_1 : i32, i32, i32
  }
  func.func @transform_4(%arg0: i32) -> (i32, i32) {
    %c0_i32 = arith.constant 0 : i32
    %c0_i32_0 = arith.constant 0 : i32
    %c0_i32_1 = arith.constant 0 : i32
    return %c0_i32, %c0_i32_0 : i32, i32
  }
  func.func @transform_5(%arg0: i32) -> (i32, i32) {
    %c0_i32 = arith.constant 0 : i32
    %c0_i32_0 = arith.constant 0 : i32
    return %arg0, %c0_i32 : i32, i32
  }
}

</mosaic_0001>

<llo_original>
// kernel: tile.8
$region0: #{tile.8}
  #allocation0 [shape = 's32[1]{0}', space=sflag, size = 0x4, scoped, tag = 'scoped memory for tile.8']
  %s0 = inlined_call_operand.vmem [shape: f32[32], index: 0, kind: input, shape index: {}]
  %s1 = inlined_call_operand.vmem [shape: f32[16,32], index: 1, kind: output, shape index: {}]
  // Predicated region
  $region2: #{tile.8} parent=0 // pred_check
    _
  $region3: #{tile.8} parent=0 // pred_check_branch
    %3 = sbr.rel (0) target = $region5
  $region4: #{tile.8} parent=0 // pred_region
    _
  $region5: #{tile.8} parent=0 // pred_fallthru
    _
  %v4 = vld [vmem:[%s0] ss:$0 sm:$0xff]
  %5 = vst [vmem:[%s1] sm:$0xff] %v4
  %s6 = scalar_lea.vmem %s1, 8
  %7 = vst [vmem:[%s6] sm:$0xff] %v4

// kernel: cheb_graph_conv.1
$region0: #{cheb_graph_conv.1}
  #allocation0 [shape = 'u32[]', space=smem, size = 0x4, offset = 0x4, fixed_abs, tag = 'smem constant byte address 0x4 - core index']
  #allocation1 [shape = 'u32[144,128]{1,0:T(1,128)}', space=vmem, size = 0x12000, scoped, tag = 'internal scratch']
  %s0 = inlined_call_operand.vmem [shape: f32[16,128], index: 0, kind: input, shape index: {}]
  %s1 = inlined_call_operand.vmem [shape: f32[128,128], index: 1, kind: input, shape index: {}]
  %s2 = inlined_call_operand.vmem [shape: f32[128,128], index: 2, kind: input, shape index: {}]
  %s3 = inlined_call_operand.vmem [shape: f32[3,128,512], index: 3, kind: input, shape index: {}]
  %s4 = inlined_call_operand.vmem [shape: f32[1,512], index: 4, kind: input, shape index: {}]
  %s5 = inlined_call_operand.vmem [shape: f32[16,512], index: 5, kind: output, shape index: {}]
  %s6 = sld [smem:[#allocation0]]
  $region53: #{cheb_graph_conv.1} parent=0
    _
  %s8 = ssub.s32 1, %s6
  %s9 = scalar_select 0, %s8, %s6
  loop: start=0, step=1, limit=4
  $region2: #{cheb_graph_conv.1} parent=0 // loop_pre_header
    _
  $region3: #{cheb_graph_conv.1} parent=0 // loop_header
    %s11 = sphi 0, %s15
    %p12 = scmp.ge.s32.totalorder %s11, 4
    %s21 = sphi 0, %s23
    %s24 = sphi 0, %s21
    %s25 = sphi 0, %s24
    %s41 = sphi 0, %s25
    %s45 = sphi 0, %s45
    %s47 = sphi 0, %s45
    %s48 = sphi 0, %s47
    %s62 = sphi 0, %s48
    %s66 = sphi 0, %s66
    %s68 = sphi 0, %s66
    %s69 = sphi 0, %s68
    %s83 = sphi 0, %s69
    %s87 = sphi 0, %s87
    %s89 = sphi 0, %s87
    %s90 = sphi 0, %s89
    %s104 = sphi 0, %s90
    %s108 = sphi 0, %s108
    %s110 = sphi 0, %s108
    %s111 = sphi 0, %s110
    %s125 = sphi 0, %s111
    %s131 = sphi 0, %s133
    %s134 = sphi 0, %s131
    %s135 = sphi 0, %s134
    %s151 = sphi 0, %s135
  $region4: #{cheb_graph_conv.1} parent=0 // loop_header_branch
    %14 = sbr.rel (%p12) target = $region8
  $region5: #{cheb_graph_conv.1} parent=0 // loop_body
    %s16 = ssub.s32 %s11, 1
    %s17 = ssub.s32 %s11, 2
    %s18 = sadd.s32 %s11, 1
    %s19 = ssub.s32 %s11, %s18
    %p20 = scmp.eq.s32.totalorder %s19, 0
    %s22 = sadd.s32 %s21, 1
    %s23 = scalar_select %p20, %s21, %s22
    %p26 = pneg %p20
    %p27 = scmp.eq.s32.totalorder %s11, 1
    %p28 = por %p26, %p27
    %p29 = scmp.ne.s32.totalorder %s21, %s24
    %p30 = scmp.eq.s32.totalorder %s11, 0
    %p31 = por %p29, %p30
    %p32 = scmp.ne.s32.totalorder %s21, %s24
    %p33 = scmp.eq.s32.totalorder %s16, 1
    %p34 = por %p32, %p33
    %p35 = scmp.ne.s32.totalorder %s24, %s25
    %p36 = scmp.eq.s32.totalorder %s16, 0
    %p37 = por %p35, %p36
    %p38 = scmp.ne.s32.totalorder %s24, %s25
    %p39 = scmp.eq.s32.totalorder %s17, 1
    %p40 = por %p38, %p39
    %p42 = scmp.ne.s32.totalorder %s25, %s41
    %p43 = scmp.eq.s32.totalorder %s17, 0
    %p44 = por %p42, %p43
    %s46 = sadd.s32 %s45, 1
    %p49 = scmp.eq.s32.totalorder %s11, 1
    %p50 = scmp.ne.s32.totalorder %s45, %s47
    %p51 = scmp.eq.s32.totalorder %s11, 0
    %p52 = por %p50, %p51
    %p53 = scmp.ne.s32.totalorder %s45, %s47
    %p54 = scmp.eq.s32.totalorder %s16, 1
    %p55 = por %p53, %p54
    %p56 = scmp.ne.s32.totalorder %s47, %s48
    %p57 = scmp.eq.s32.totalorder %s16, 0
    %p58 = por %p56, %p57
    %p59 = scmp.ne.s32.totalorder %s47, %s48
    %p60 = scmp.eq.s32.totalorder %s17, 1
    %p61 = por %p59, %p60
    %p63 = scmp.ne.s32.totalorder %s48, %s62
    %p64 = scmp.eq.s32.totalorder %s17, 0
    %p65 = por %p63, %p64
    %s67 = sadd.s32 %s66, 1
    %p70 = scmp.eq.s32.totalorder %s11, 1
    %p71 = scmp.ne.s32.totalorder %s66, %s68
    %p72 = scmp.eq.s32.totalorder %s11, 0
    %p73 = por %p71, %p72
    %p74 = scmp.ne.s32.totalorder %s66, %s68
    %p75 = scmp.eq.s32.totalorder %s16, 1
    %p76 = por %p74, %p75
    %p77 = scmp.ne.s32.totalorder %s68, %s69
    %p78 = scmp.eq.s32.totalorder %s16, 0
    %p79 = por %p77, %p78
    %p80 = scmp.ne.s32.totalorder %s68, %s69
    %p81 = scmp.eq.s32.totalorder %s17, 1
    %p82 = por %p80, %p81
    %p84 = scmp.ne.s32.totalorder %s69, %s83
    %p85 = scmp.eq.s32.totalorder %s17, 0
    %p86 = por %p84, %p85
    %s88 = sadd.s32 %s87, 1
    %p91 = scmp.eq.s32.totalorder %s11, 1
    %p92 = scmp.ne.s32.totalorder %s87, %s89
    %p93 = scmp.eq.s32.totalorder %s11, 0
    %p94 = por %p92, %p93
    %p95 = scmp.ne.s32.totalorder %s87, %s89
    %p96 = scmp.eq.s32.totalorder %s16, 1
    %p97 = por %p95, %p96
    %p98 = scmp.ne.s32.totalorder %s89, %s90
    %p99 = scmp.eq.s32.totalorder %s16, 0
    %p100 = por %p98, %p99
    %p101 = scmp.ne.s32.totalorder %s89, %s90
    %p102 = scmp.eq.s32.totalorder %s17, 1
    %p103 = por %p101, %p102
    %p105 = scmp.ne.s32.totalorder %s90, %s104
    %p106 = scmp.eq.s32.totalorder %s17, 0
    %p107 = por %p105, %p106
    %s109 = sadd.s32 %s108, 1
    %p112 = scmp.eq.s32.totalorder %s11, 1
    %p113 = scmp.ne.s32.totalorder %s108, %s110
    %p114 = scmp.eq.s32.totalorder %s11, 0
    %p115 = por %p113, %p114
    %p116 = scmp.ne.s32.totalorder %s108, %s110
    %p117 = scmp.eq.s32.totalorder %s16, 1
    %p118 = por %p116, %p117
    %p119 = scmp.ne.s32.totalorder %s110, %s111
    %p120 = scmp.eq.s32.totalorder %s16, 0
    %p121 = por %p119, %p120
    %p122 = scmp.ne.s32.totalorder %s110, %s111
    %p123 = scmp.eq.s32.totalorder %s17, 1
    %p124 = por %p122, %p123
    %p126 = scmp.ne.s32.totalorder %s111, %s125
    %p127 = scmp.eq.s32.totalorder %s17, 0
    %p128 = por %p126, %p127
    %s129 = ssub.s32 %s11, %s18
    %p130 = scmp.eq.s32.totalorder %s129, 0
    %s132 = sadd.s32 %s131, 1
    %s133 = scalar_select %p130, %s131, %s132
    %p136 = pneg %p130
    %p137 = scmp.eq.s32.totalorder %s11, 1
    %p138 = por %p136, %p137
    %p139 = scmp.ne.s32.totalorder %s131, %s134
    %p140 = scmp.eq.s32.totalorder %s11, 0
    %p141 = por %p139, %p140
    %p142 = scmp.ne.s32.totalorder %s131, %s134
    %p143 = scmp.eq.s32.totalorder %s16, 1
    %p144 = por %p142, %p143
    %p145 = scmp.ne.s32.totalorder %s134, %s135
    %p146 = scmp.eq.s32.totalorder %s16, 0
    %p147 = por %p145, %p146
    %p148 = scmp.ne.s32.totalorder %s134, %s135
    %p149 = scmp.eq.s32.totalorder %s17, 1
    %p150 = por %p148, %p149
    %p152 = scmp.ne.s32.totalorder %s135, %s151
    %p153 = scmp.eq.s32.totalorder %s17, 0
    %p154 = por %p152, %p153
    %p155 = scmp.le.s32.totalorder 1, %s11
    %p156 = scmp.lt.s32.totalorder %s11, 3
    %p157 = pnand %p155, %p156
    %p158 = pneg %p157
    // Predicated region
    $region9: #{cheb_graph_conv.1} parent=5 // pred_check
      _
    $region10: #{cheb_graph_conv.1} parent=5 // pred_check_branch
      %160 = sbr.rel (%p157) target = $region12
    $region11: #{cheb_graph_conv.1} parent=5 // pred_region
      %s161 = ssub.s32 %s11, 1
      // Predicated region
      $region13: #{cheb_graph_conv.1} parent=11 // pred_check
        %p162 = pneg %p58
      $region14: #{cheb_graph_conv.1} parent=11 // pred_check_branch
        %164 = sbr.rel (%p162) target = $region16
      $region15: #{cheb_graph_conv.1} parent=11 // pred_region
        _
      $region16: #{cheb_graph_conv.1} parent=11 // pred_fallthru
        _
      // Predicated region
      $region17: #{cheb_graph_conv.1} parent=11 // pred_check
        %p165 = pneg %p79
      $region18: #{cheb_graph_conv.1} parent=11 // pred_check_branch
        %167 = sbr.rel (%p165) target = $region20
      $region19: #{cheb_graph_conv.1} parent=11 // pred_region
        _
      $region20: #{cheb_graph_conv.1} parent=11 // pred_fallthru
        _
      // Predicated region
      $region21: #{cheb_graph_conv.1} parent=11 // pred_check
        %p168 = pneg %p100
      $region22: #{cheb_graph_conv.1} parent=11 // pred_check_branch
        %170 = sbr.rel (%p168) target = $region24
      $region23: #{cheb_graph_conv.1} parent=11 // pred_region
        _
      $region24: #{cheb_graph_conv.1} parent=11 // pred_fallthru
        _
      // Predicated region
      $region25: #{cheb_graph_conv.1} parent=11 // pred_check
        %p171 = pneg %p121
      $region26: #{cheb_graph_conv.1} parent=11 // pred_check_branch
        %173 = sbr.rel (%p171) target = $region28
      $region27: #{cheb_graph_conv.1} parent=11 // pred_region
        _
      $region28: #{cheb_graph_conv.1} parent=11 // pred_fallthru
        _
    $region12: #{cheb_graph_conv.1} parent=5 // pred_fallthru
      _
    %p174 = scmp.lt.s32.totalorder %s11, 2
    // Predicated region
    $region29: #{cheb_graph_conv.1} parent=5 // pred_check
      %p175 = pneg %p174
    $region30: #{cheb_graph_conv.1} parent=5 // pred_check_branch
      %177 = sbr.rel (%p175) target = $region32
    $region31: #{cheb_graph_conv.1} parent=5 // pred_region
      // Predicated region
      $region33: #{cheb_graph_conv.1} parent=31 // pred_check
        %p178 = pneg %p31
      $region34: #{cheb_graph_conv.1} parent=31 // pred_check_branch
        %180 = sbr.rel (%p178) target = $region36
      $region35: #{cheb_graph_conv.1} parent=31 // pred_region
        %p181 = scmp.lt.s32.totalorder %s11, 1
        %s182 = scalar_select %p181, %s11, 1
        %s183 = smul.addr %s182, 8
        %s184 = scalar_lea.vmem %s0, %s183
      $region36: #{cheb_graph_conv.1} parent=31 // pred_fallthru
        _
    $region32: #{cheb_graph_conv.1} parent=5 // pred_fallthru
      _
    %p185 = scmp.le.s32.totalorder 1, %s11
    %p186 = scmp.lt.s32.totalorder %s11, 3
    %p187 = pnand %p185, %p186
    %p188 = pneg %p187
    // Predicated region
    $region37: #{cheb_graph_conv.1} parent=5 // pred_check
      _
    $region38: #{cheb_graph_conv.1} parent=5 // pred_check_branch
      %190 = sbr.rel (%p187) target = $region40
    $region39: #{cheb_graph_conv.1} parent=5 // pred_region
      %s191 = ssub.s32 %s11, 1
      %p192 = scmp.lt.s32.totalorder %s16, 1
      %s193 = scalar_select %p192, %s16, 1
      %s194 = smul.addr %s193, 8
      %s195 = scalar_lea.vmem %s0, %s194
      %p196 = pneg %p37
      %p197 = pneg %p34
      %p198 = pneg %p58
      %p199 = pneg %p55
      %p200 = pneg %p79
      %p201 = pneg %p76
      %p202 = pneg %p100
      %p203 = pneg %p97
      %p204 = pneg %p121
      %p205 = pneg %p118
      %p206 = pneg %p147
      %p207 = pneg %p144
      %p208 = scmp.lt.s32.totalorder %s16, 1
      %s209 = scalar_select %p208, %s16, 1
      %s210 = smul.addr %s209, 4
      %s211 = smul.addr %s210, 8
      %s212 = scalar_lea.vmem %s5, %s211
      %p213 = scmp.lt.s32.totalorder %s16, 1
      %s214 = scalar_select %p213, %s16, 1
      %s215 = smul.addr %s214, 8
      %s216 = scalar_lea.vmem %s0, %s215
      %p217 = scmp.lt.s32.totalorder %s16, 1
      %s218 = scalar_select %p217, %s16, 1
      %s219 = smul.addr %s218, 4
      %s220 = smul.addr %s219, 8
      %s221 = scalar_lea.vmem %s5, %s220
      %v222 = vld [vmem:[%s216] sm:$0xff]
      %v223 = vld [vmem:[%s3] sm:$0xff]
      %v224 = vld [vmem:[%s3 + $0x8] sm:$0xff]
      %v225 = vld [vmem:[%s3 + $0x10] sm:$0xff]
      %v226 = vld [vmem:[%s3 + $0x18] sm:$0xff]
      %v227 = vld [vmem:[%s3 + $0x20] sm:$0xff]
      %v228 = vld [vmem:[%s3 + $0x28] sm:$0xff]
      %v229 = vld [vmem:[%s3 + $0x30] sm:$0xff]
      %v230 = vld [vmem:[%s3 + $0x38] sm:$0xff]
      %v231 = vld [vmem:[%s3 + $0x40] sm:$0xff]
      %v232 = vld [vmem:[%s3 + $0x48] sm:$0xff]
      %v233 = vld [vmem:[%s3 + $0x50] sm:$0xff]
      %v234 = vld [vmem:[%s3 + $0x58] sm:$0xff]
      %v235 = vld [vmem:[%s3 + $0x60] sm:$0xff]
      %v236 = vld [vmem:[%s3 + $0x68] sm:$0xff]
      %v237 = vld [vmem:[%s3 + $0x70] sm:$0xff]
      %v238 = vld [vmem:[%s3 + $0x78] sm:$0xff]
      %v239 = vld [vmem:[%s3 + $0x80] sm:$0xff]
      %v240 = vld [vmem:[%s3 + $0x88] sm:$0xff]
      %v241 = vld [vmem:[%s3 + $0x90] sm:$0xff]
      %v242 = vld [vmem:[%s3 + $0x98] sm:$0xff]
      %v243 = vld [vmem:[%s3 + $0xa0] sm:$0xff]
      %v244 = vld [vmem:[%s3 + $0xa8] sm:$0xff]
      %v245 = vld [vmem:[%s3 + $0xb0] sm:$0xff]
      %v246 = vld [vmem:[%s3 + $0xb8] sm:$0xff]
      %v247 = vld [vmem:[%s3 + $0xc0] sm:$0xff]
      %v248 = vld [vmem:[%s3 + $0xc8] sm:$0xff]
      %v249 = vld [vmem:[%s3 + $0xd0] sm:$0xff]
      %v250 = vld [vmem:[%s3 + $0xd8] sm:$0xff]
      %v251 = vld [vmem:[%s3 + $0xe0] sm:$0xff]
      %v252 = vld [vmem:[%s3 + $0xe8] sm:$0xff]
      %v253 = vld [vmem:[%s3 + $0xf0] sm:$0xff]
      %v254 = vld [vmem:[%s3 + $0xf8] sm:$0xff]
      %v255 = vld [vmem:[%s3 + $0x100] sm:$0xff]
      %v256 = vld [vmem:[%s3 + $0x108] sm:$0xff]
      %v257 = vld [vmem:[%s3 + $0x110] sm:$0xff]
      %v258 = vld [vmem:[%s3 + $0x118] sm:$0xff]
      %v259 = vld [vmem:[%s3 + $0x120] sm:$0xff]
      %v260 = vld [vmem:[%s3 + $0x128] sm:$0xff]
      %v261 = vld [vmem:[%s3 + $0x130] sm:$0xff]
      %v262 = vld [vmem:[%s3 + $0x138] sm:$0xff]
      %v263 = vld [vmem:[%s3 + $0x140] sm:$0xff]
      %v264 = vld [vmem:[%s3 + $0x148] sm:$0xff]
      %v265 = vld [vmem:[%s3 + $0x150] sm:$0xff]
      %v266 = vld [vmem:[%s3 + $0x158] sm:$0xff]
      %v267 = vld [vmem:[%s3 + $0x160] sm:$0xff]
      %v268 = vld [vmem:[%s3 + $0x168] sm:$0xff]
      %v269 = vld [vmem:[%s3 + $0x170] sm:$0xff]
      %v270 = vld [vmem:[%s3 + $0x178] sm:$0xff]
      %v271 = vld [vmem:[%s3 + $0x180] sm:$0xff]
      %v272 = vld [vmem:[%s3 + $0x188] sm:$0xff]
      %v273 = vld [vmem:[%s3 + $0x190] sm:$0xff]
      %v274 = vld [vmem:[%s3 + $0x198] sm:$0xff]
      %v275 = vld [vmem:[%s3 + $0x1a0] sm:$0xff]
      %v276 = vld [vmem:[%s3 + $0x1a8] sm:$0xff]
      %v277 = vld [vmem:[%s3 + $0x1b0] sm:$0xff]
      %v278 = vld [vmem:[%s3 + $0x1b8] sm:$0xff]
      %v279 = vld [vmem:[%s3 + $0x1c0] sm:$0xff]
      %v280 = vld [vmem:[%s3 + $0x1c8] sm:$0xff]
      %v281 = vld [vmem:[%s3 + $0x1d0] sm:$0xff]
      %v282 = vld [vmem:[%s3 + $0x1d8] sm:$0xff]
      %v283 = vld [vmem:[%s3 + $0x1e0] sm:$0xff]
      %v284 = vld [vmem:[%s3 + $0x1e8] sm:$0xff]
      %v285 = vld [vmem:[%s3 + $0x1f0] sm:$0xff]
      %v286 = vld [vmem:[%s3 + $0x1f8] sm:$0xff]
      %v287 = vld [vmem:[%s1] sm:$0xff]
      %v288 = vld [vmem:[%s1 + $0x8] sm:$0xff]
      %v289 = vld [vmem:[%s1 + $0x10] sm:$0xff]
      %v290 = vld [vmem:[%s1 + $0x18] sm:$0xff]
      %v291 = vld [vmem:[%s1 + $0x20] sm:$0xff]
      %v292 = vld [vmem:[%s1 + $0x28] sm:$0xff]
      %v293 = vld [vmem:[%s1 + $0x30] sm:$0xff]
      %v294 = vld [vmem:[%s1 + $0x38] sm:$0xff]
      %v295 = vld [vmem:[%s1 + $0x40] sm:$0xff]
      %v296 = vld [vmem:[%s1 + $0x48] sm:$0xff]
      %v297 = vld [vmem:[%s1 + $0x50] sm:$0xff]
      %v298 = vld [vmem:[%s1 + $0x58] sm:$0xff]
      %v299 = vld [vmem:[%s1 + $0x60] sm:$0xff]
      %v300 = vld [vmem:[%s1 + $0x68] sm:$0xff]
      %v301 = vld [vmem:[%s1 + $0x70] sm:$0xff]
      %v302 = vld [vmem:[%s1 + $0x78] sm:$0xff]
      %303 = vmatprep.subr.mxu0 0.0
      %304 = vmatpush1.msra.mxu0 %v287
      %305 = vmatprep.subr.mxu0 0.0
      %306 = vmatpush1.msra.mxu0 %v288
      %307 = vmatprep.subr.mxu0 0.0
      %308 = vmatpush1.msra.mxu0 %v289
      %309 = vmatprep.subr.mxu0 0.0
      %310 = vmatpush1.msra.mxu0 %v290
      %311 = vmatprep.subr.mxu0 0.0
      %312 = vmatpush1.msra.mxu0 %v291
      %313 = vmatprep.subr.mxu0 0.0
      %314 = vmatpush1.msra.mxu0 %v292
      %315 = vmatprep.subr.mxu0 0.0
      %316 = vmatpush1.msra.mxu0 %v293
      %317 = vmatprep.subr.mxu0 0.0
      %318 = vmatpush1.msra.mxu0 %v294
      %319 = vmatprep.subr.mxu0 0.0
      %320 = vmatpush1.msra.mxu0 %v295
      %321 = vmatprep.subr.mxu0 0.0
      %322 = vmatpush1.msra.mxu0 %v296
      %323 = vmatprep.subr.mxu0 0.0
      %324 = vmatpush1.msra.mxu0 %v297
      %325 = vmatprep.subr.mxu0 0.0
      %326 = vmatpush1.msra.mxu0 %v298
      %327 = vmatprep.subr.mxu0 0.0
      %328 = vmatpush1.msra.mxu0 %v299
      %329 = vmatprep.subr.mxu0 0.0
      %330 = vmatpush1.msra.mxu0 %v300
      %331 = vmatprep.subr.mxu0 0.0
      %332 = vmatpush1.msra.mxu0 %v301
      %333 = vmatprep.subr.mxu0 0.0
      %334 = vmatpush1.msra.mxu0 %v302
      %335 = vmatprep.subr.mxu0 0.0
      %336 = vmatpush1.msra.mxu0 0.0
      %337 = vmatprep.subr.mxu0 0.0
      %338 = vmatpush1.msra.mxu0 0.0
      %339 = vmatprep.subr.mxu0 0.0
      %340 = vmatpush1.msra.mxu0 0.0
      %341 = vmatprep.subr.mxu0 0.0
      %342 = vmatpush1.msra.mxu0 0.0
      %343 = vmatprep.subr.mxu0 0.0
      %344 = vmatpush1.msra.mxu0 0.0
      %345 = vmatprep.subr.mxu0 0.0
      %346 = vmatpush1.msra.mxu0 0.0
      %347 = vmatprep.subr.mxu0 0.0
      %348 = vmatpush1.msra.mxu0 0.0
      %349 = vmatprep.subr.mxu0 0.0
      %350 = vmatpush1.msra.mxu0 0.0
      %351 = vmatprep.subr.mxu0 0.0
      %352 = vmatpush1.msra.mxu0 0.0
      %353 = vmatprep.subr.mxu0 0.0
      %354 = vmatpush1.msra.mxu0 0.0
      %355 = vmatprep.subr.mxu0 0.0
      %356 = vmatpush1.msra.mxu0 0.0
      %357 = vmatprep.subr.mxu0 0.0
      %358 = vmatpush1.msra.mxu0 0.0
      %359 = vmatprep.subr.mxu0 0.0
      %360 = vmatpush1.msra.mxu0 0.0
      %361 = vmatprep.subr.mxu0 0.0
      %362 = vmatpush1.msra.mxu0 0.0
      %363 = vmatprep.subr.mxu0 0.0
      %364 = vmatpush1.msra.mxu0 0.0
      %365 = vmatprep.subr.mxu0 0.0
      %366 = vmatpush1.msra.mxu0 0.0
      %367 = vmatprep.mubr.f32.mxu0 0.0
      %368 = vmatmul.mubr.f32.gmra.mrb[0].mxu0 %v222
      %v369 = vpop.f32.mrb[0].mxu0
      %v370 = vadd.f32 0.0, %v369
      %v371 = vpop.f32.mrb[0].mxu0
      %372 = vdwg.mxu0
      %s373 = scalar_lea.vmem %s3, 512
      %v374 = vld [vmem:[%s373] sm:$0xff]
      %v375 = vld [vmem:[%s373 + $0x8] sm:$0xff]
      %v376 = vld [vmem:[%s373 + $0x10] sm:$0xff]
      %v377 = vld [vmem:[%s373 + $0x18] sm:$0xff]
      %v378 = vld [vmem:[%s373 + $0x20] sm:$0xff]
      %v379 = vld [vmem:[%s373 + $0x28] sm:$0xff]
      %v380 = vld [vmem:[%s373 + $0x30] sm:$0xff]
      %v381 = vld [vmem:[%s373 + $0x38] sm:$0xff]
      %v382 = vld [vmem:[%s373 + $0x40] sm:$0xff]
      %v383 = vld [vmem:[%s373 + $0x48] sm:$0xff]
      %v384 = vld [vmem:[%s373 + $0x50] sm:$0xff]
      %v385 = vld [vmem:[%s373 + $0x58] sm:$0xff]
      %v386 = vld [vmem:[%s373 + $0x60] sm:$0xff]
      %v387 = vld [vmem:[%s373 + $0x68] sm:$0xff]
      %v388 = vld [vmem:[%s373 + $0x70] sm:$0xff]
      %v389 = vld [vmem:[%s373 + $0x78] sm:$0xff]
      %v390 = vld [vmem:[%s373 + $0x80] sm:$0xff]
      %v391 = vld [vmem:[%s373 + $0x88] sm:$0xff]
      %v392 = vld [vmem:[%s373 + $0x90] sm:$0xff]
      %v393 = vld [vmem:[%s373 + $0x98] sm:$0xff]
      %v394 = vld [vmem:[%s373 + $0xa0] sm:$0xff]
      %v395 = vld [vmem:[%s373 + $0xa8] sm:$0xff]
      %v396 = vld [vmem:[%s373 + $0xb0] sm:$0xff]
      %v397 = vld [vmem:[%s373 + $0xb8] sm:$0xff]
      %v398 = vld [vmem:[%s373 + $0xc0] sm:$0xff]
      %v399 = vld [vmem:[%s373 + $0xc8] sm:$0xff]
      %v400 = vld [vmem:[%s373 + $0xd0] sm:$0xff]
      %v401 = vld [vmem:[%s373 + $0xd8] sm:$0xff]
      %v402 = vld [vmem:[%s373 + $0xe0] sm:$0xff]
      %v403 = vld [vmem:[%s373 + $0xe8] sm:$0xff]
      %v404 = vld [vmem:[%s373 + $0xf0] sm:$0xff]
      %v405 = vld [vmem:[%s373 + $0xf8] sm:$0xff]
      %v406 = vld [vmem:[%s373 + $0x100] sm:$0xff]
      %v407 = vld [vmem:[%s373 + $0x108] sm:$0xff]
      %v408 = vld [vmem:[%s373 + $0x110] sm:$0xff]
      %v409 = vld [vmem:[%s373 + $0x118] sm:$0xff]
      %v410 = vld [vmem:[%s373 + $0x120] sm:$0xff]
      %v411 = vld [vmem:[%s373 + $0x128] sm:$0xff]
      %v412 = vld [vmem:[%s373 + $0x130] sm:$0xff]
      %v413 = vld [vmem:[%s373 + $0x138] sm:$0xff]
      %v414 = vld [vmem:[%s373 + $0x140] sm:$0xff]
      %v415 = vld [vmem:[%s373 + $0x148] sm:$0xff]
      %v416 = vld [vmem:[%s373 + $0x150] sm:$0xff]
      %v417 = vld [vmem:[%s373 + $0x158] sm:$0xff]
      %v418 = vld [vmem:[%s373 + $0x160] sm:$0xff]
      %v419 = vld [vmem:[%s373 + $0x168] sm:$0xff]
      %v420 = vld [vmem:[%s373 + $0x170] sm:$0xff]
      %v421 = vld [vmem:[%s373 + $0x178] sm:$0xff]
      %v422 = vld [vmem:[%s373 + $0x180] sm:$0xff]
      %v423 = vld [vmem:[%s373 + $0x188] sm:$0xff]
      %v424 = vld [vmem:[%s373 + $0x190] sm:$0xff]
      %v425 = vld [vmem:[%s373 + $0x198] sm:$0xff]
      %v426 = vld [vmem:[%s373 + $0x1a0] sm:$0xff]
      %v427 = vld [vmem:[%s373 + $0x1a8] sm:$0xff]
      %v428 = vld [vmem:[%s373 + $0x1b0] sm:$0xff]
      %v429 = vld [vmem:[%s373 + $0x1b8] sm:$0xff]
      %v430 = vld [vmem:[%s373 + $0x1c0] sm:$0xff]
      %v431 = vld [vmem:[%s373 + $0x1c8] sm:$0xff]
      %v432 = vld [vmem:[%s373 + $0x1d0] sm:$0xff]
      %v433 = vld [vmem:[%s373 + $0x1d8] sm:$0xff]
      %v434 = vld [vmem:[%s373 + $0x1e0] sm:$0xff]
      %v435 = vld [vmem:[%s373 + $0x1e8] sm:$0xff]
      %v436 = vld [vmem:[%s373 + $0x1f0] sm:$0xff]
      %v437 = vld [vmem:[%s373 + $0x1f8] sm:$0xff]
      %438 = vmatprep.subr.mxu0 %v375
      %439 = vmatpush1.msra.mxu0 %v374
      %440 = vmatprep.subr.mxu0 %v379
      %441 = vmatpush1.msra.mxu0 %v378
      %442 = vmatprep.subr.mxu0 %v383
      %443 = vmatpush1.msra.mxu0 %v382
      %444 = vmatprep.subr.mxu0 %v387
      %445 = vmatpush1.msra.mxu0 %v386
      %446 = vmatprep.subr.mxu0 %v391
      %447 = vmatpush1.msra.mxu0 %v390
      %448 = vmatprep.subr.mxu0 %v395
      %449 = vmatpush1.msra.mxu0 %v394
      %450 = vmatprep.subr.mxu0 %v399
      %451 = vmatpush1.msra.mxu0 %v398
      %452 = vmatprep.subr.mxu0 %v403
      %453 = vmatpush1.msra.mxu0 %v402
      %454 = vmatprep.subr.mxu0 %v407
      %455 = vmatpush1.msra.mxu0 %v406
      %456 = vmatprep.subr.mxu0 %v411
      %457 = vmatpush1.msra.mxu0 %v410
      %458 = vmatprep.subr.mxu0 %v415
      %459 = vmatpush1.msra.mxu0 %v414
      %460 = vmatprep.subr.mxu0 %v419
      %461 = vmatpush1.msra.mxu0 %v418
      %462 = vmatprep.subr.mxu0 %v423
      %463 = vmatpush1.msra.mxu0 %v422
      %464 = vmatprep.subr.mxu0 %v427
      %465 = vmatpush1.msra.mxu0 %v426
      %466 = vmatprep.subr.mxu0 %v431
      %467 = vmatpush1.msra.mxu0 %v430
      %468 = vmatprep.subr.mxu0 %v435
      %469 = vmatpush1.msra.mxu0 %v434
      %470 = vmatprep.subr.mxu0 0.0
      %471 = vmatpush1.msra.mxu0 0.0
      %472 = vmatprep.subr.mxu0 0.0
      %473 = vmatpush1.msra.mxu0 0.0
      %474 = vmatprep.subr.mxu0 0.0
      %475 = vmatpush1.msra.mxu0 0.0
      %476 = vmatprep.subr.mxu0 0.0
      %477 = vmatpush1.msra.mxu0 0.0
      %478 = vmatprep.subr.mxu0 0.0
      %479 = vmatpush1.msra.mxu0 0.0
      %480 = vmatprep.subr.mxu0 0.0
      %481 = vmatpush1.msra.mxu0 0.0
      %482 = vmatprep.subr.mxu0 0.0
      %483 = vmatpush1.msra.mxu0 0.0
      %484 = vmatprep.subr.mxu0 0.0
      %485 = vmatpush1.msra.mxu0 0.0
      %486 = vmatprep.subr.mxu0 0.0
      %487 = vmatpush1.msra.mxu0 0.0
      %488 = vmatprep.subr.mxu0 0.0
      %489 = vmatpush1.msra.mxu0 0.0
      %490 = vmatprep.subr.mxu0 0.0
      %491 = vmatpush1.msra.mxu0 0.0
      %492 = vmatprep.subr.mxu0 0.0
      %493 = vmatpush1.msra.mxu0 0.0
      %494 = vmatprep.subr.mxu0 0.0
      %495 = vmatpush1.msra.mxu0 0.0
      %496 = vmatprep.subr.mxu0 0.0
      %497 = vmatpush1.msra.mxu0 0.0
      %498 = vmatprep.subr.mxu0 0.0
      %499 = vmatpush1.msra.mxu0 0.0
      %500 = vmatprep.subr.mxu0 0.0
      %501 = vmatpush1.msra.mxu0 0.0
      %502 = vmatprep.mubr.f32.mxu0 0.0
      %503 = vmatmul.mubr.f32.gmra.mrb[0].mxu0 %v370
      %v504 = vpop.f32.mrb[0].mxu0
      %v505 = vadd.f32 0.0, %v504
      %v506 = vpop.f32.mrb[0].mxu0
      %v507 = vadd.f32 0.0, %v506
      %508 = vdwg.mxu0
      %509 = vmatprep.subr.mxu0 %v377
      %510 = vmatpush1.msra.mxu0 %v376
      %511 = vmatprep.subr.mxu0 %v381
      %512 = vmatpush1.msra.mxu0 %v380
      %513 = vmatprep.subr.mxu0 %v385
      %514 = vmatpush1.msra.mxu0 %v384
      %515 = vmatprep.subr.mxu0 %v389
      %516 = vmatpush1.msra.mxu0 %v388
      %517 = vmatprep.subr.mxu0 %v393
      %518 = vmatpush1.msra.mxu0 %v392
      %519 = vmatprep.subr.mxu0 %v397
      %520 = vmatpush1.msra.mxu0 %v396
      %521 = vmatprep.subr.mxu0 %v401
      %522 = vmatpush1.msra.mxu0 %v400
      %523 = vmatprep.subr.mxu0 %v405
      %524 = vmatpush1.msra.mxu0 %v404
      %525 = vmatprep.subr.mxu0 %v409
      %526 = vmatpush1.msra.mxu0 %v408
      %527 = vmatprep.subr.mxu0 %v413
      %528 = vmatpush1.msra.mxu0 %v412
      %529 = vmatprep.subr.mxu0 %v417
      %530 = vmatpush1.msra.mxu0 %v416
      %531 = vmatprep.subr.mxu0 %v421
      %532 = vmatpush1.msra.mxu0 %v420
      %533 = vmatprep.subr.mxu0 %v425
      %534 = vmatpush1.msra.mxu0 %v424
      %535 = vmatprep.subr.mxu0 %v429
      %536 = vmatpush1.msra.mxu0 %v428
      %537 = vmatprep.subr.mxu0 %v433
      %538 = vmatpush1.msra.mxu0 %v432
      %539 = vmatprep.subr.mxu0 %v437
      %540 = vmatpush1.msra.mxu0 %v436
      %541 = vmatprep.subr.mxu0 0.0
      %542 = vmatpush1.msra.mxu0 0.0
      %543 = vmatprep.subr.mxu0 0.0
      %544 = vmatpush1.msra.mxu0 0.0
      %545 = vmatprep.subr.mxu0 0.0
      %546 = vmatpush1.msra.mxu0 0.0
      %547 = vmatprep.subr.mxu0 0.0
      %548 = vmatpush1.msra.mxu0 0.0
      %549 = vmatprep.subr.mxu0 0.0
      %550 = vmatpush1.msra.mxu0 0.0
      %551 = vmatprep.subr.mxu0 0.0
      %552 = vmatpush1.msra.mxu0 0.0
      %553 = vmatprep.subr.mxu0 0.0
      %554 = vmatpush1.msra.mxu0 0.0
      %555 = vmatprep.subr.mxu0 0.0
      %556 = vmatpush1.msra.mxu0 0.0
      %557 = vmatprep.subr.mxu0 0.0
      %558 = vmatpush1.msra.mxu0 0.0
      %559 = vmatprep.subr.mxu0 0.0
      %560 = vmatpush1.msra.mxu0 0.0
      %561 = vmatprep.subr.mxu0 0.0
      %562 = vmatpush1.msra.mxu0 0.0
      %563 = vmatprep.subr.mxu0 0.0
      %564 = vmatpush1.msra.mxu0 0.0
      %565 = vmatprep.subr.mxu0 0.0
      %566 = vmatpush1.msra.mxu0 0.0
      %567 = vmatprep.subr.mxu0 0.0
      %568 = vmatpush1.msra.mxu0 0.0
      %569 = vmatprep.subr.mxu0 0.0
      %570 = vmatpush1.msra.mxu0 0.0
      %571 = vmatprep.subr.mxu0 0.0
      %572 = vmatpush1.msra.mxu0 0.0
      %573 = vmatprep.mubr.f32.mxu0 0.0
      %574 = vmatmul.mubr.f32.gmra.mrb[0].mxu0 %v370
      %v575 = vpop.f32.mrb[0].mxu0
      %v576 = vadd.f32 0.0, %v575
      %v577 = vpop.f32.mrb[0].mxu0
      %v578 = vadd.f32 0.0, %v577
      %579 = vdwg.mxu0
      %580 = vmatprep.subr.mxu0 %v224
      %581 = vmatpush1.msra.mxu0 %v223
      %582 = vmatprep.subr.mxu0 %v228
      %583 = vmatpush1.msra.mxu0 %v227
      %584 = vmatprep.subr.mxu0 %v232
      %585 = vmatpush1.msra.mxu0 %v231
      %586 = vmatprep.subr.mxu0 %v236
      %587 = vmatpush1.msra.mxu0 %v235
      %588 = vmatprep.subr.mxu0 %v240
      %589 = vmatpush1.msra.mxu0 %v239
      %590 = vmatprep.subr.mxu0 %v244
      %591 = vmatpush1.msra.mxu0 %v243
      %592 = vmatprep.subr.mxu0 %v248
      %593 = vmatpush1.msra.mxu0 %v247
      %594 = vmatprep.subr.mxu0 %v252
      %595 = vmatpush1.msra.mxu0 %v251
      %596 = vmatprep.subr.mxu0 %v256
      %597 = vmatpush1.msra.mxu0 %v255
      %598 = vmatprep.subr.mxu0 %v260
      %599 = vmatpush1.msra.mxu0 %v259
      %600 = vmatprep.subr.mxu0 %v264
      %601 = vmatpush1.msra.mxu0 %v263
      %602 = vmatprep.subr.mxu0 %v268
      %603 = vmatpush1.msra.mxu0 %v267
      %604 = vmatprep.subr.mxu0 %v272
      %605 = vmatpush1.msra.mxu0 %v271
      %606 = vmatprep.subr.mxu0 %v276
      %607 = vmatpush1.msra.mxu0 %v275
      %608 = vmatprep.subr.mxu0 %v280
      %609 = vmatpush1.msra.mxu0 %v279
      %610 = vmatprep.subr.mxu0 %v284
      %611 = vmatpush1.msra.mxu0 %v283
      %612 = vmatprep.subr.mxu0 0.0
      %613 = vmatpush1.msra.mxu0 0.0
      %614 = vmatprep.subr.mxu0 0.0
      %615 = vmatpush1.msra.mxu0 0.0
      %616 = vmatprep.subr.mxu0 0.0
      %617 = vmatpush1.msra.mxu0 0.0
      %618 = vmatprep.subr.mxu0 0.0
      %619 = vmatpush1.msra.mxu0 0.0
      %620 = vmatprep.subr.mxu0 0.0
      %621 = vmatpush1.msra.mxu0 0.0
      %622 = vmatprep.subr.mxu0 0.0
      %623 = vmatpush1.msra.mxu0 0.0
      %624 = vmatprep.subr.mxu0 0.0
      %625 = vmatpush1.msra.mxu0 0.0
      %626 = vmatprep.subr.mxu0 0.0
      %627 = vmatpush1.msra.mxu0 0.0
      %628 = vmatprep.subr.mxu0 0.0
      %629 = vmatpush1.msra.mxu0 0.0
      %630 = vmatprep.subr.mxu0 0.0
      %631 = vmatpush1.msra.mxu0 0.0
      %632 = vmatprep.subr.mxu0 0.0
      %633 = vmatpush1.msra.mxu0 0.0
      %634 = vmatprep.subr.mxu0 0.0
      %635 = vmatpush1.msra.mxu0 0.0
      %636 = vmatprep.subr.mxu0 0.0
      %637 = vmatpush1.msra.mxu0 0.0
      %638 = vmatprep.subr.mxu0 0.0
      %639 = vmatpush1.msra.mxu0 0.0
      %640 = vmatprep.subr.mxu0 0.0
      %641 = vmatpush1.msra.mxu0 0.0
      %642 = vmatprep.subr.mxu0 0.0
      %643 = vmatpush1.msra.mxu0 0.0
      %644 = vmatprep.mubr.f32.mxu0 0.0
      %645 = vmatmul.mubr.f32.gmra.mrb[0].mxu0 %v222
      %v646 = vpop.f32.mrb[0].mxu0
      %v647 = vadd.f32 %v505, %v646
      %v648 = vpop.f32.mrb[0].mxu0
      %v649 = vadd.f32 %v507, %v648
      %650 = vdwg.mxu0
      %651 = vmatprep.subr.mxu0 %v226
      %652 = vmatpush1.msra.mxu0 %v225
      %653 = vmatprep.subr.mxu0 %v230
      %654 = vmatpush1.msra.mxu0 %v229
      %655 = vmatprep.subr.mxu0 %v234
      %656 = vmatpush1.msra.mxu0 %v233
      %657 = vmatprep.subr.mxu0 %v238
      %658 = vmatpush1.msra.mxu0 %v237
      %659 = vmatprep.subr.mxu0 %v242
      %660 = vmatpush1.msra.mxu0 %v241
      %661 = vmatprep.subr.mxu0 %v246
      %662 = vmatpush1.msra.mxu0 %v245
      %663 = vmatprep.subr.mxu0 %v250
      %664 = vmatpush1.msra.mxu0 %v249
      %665 = vmatprep.subr.mxu0 %v254
      %666 = vmatpush1.msra.mxu0 %v253
      %667 = vmatprep.subr.mxu0 %v258
      %668 = vmatpush1.msra.mxu0 %v257
      %669 = vmatprep.subr.mxu0 %v262
      %670 = vmatpush1.msra.mxu0 %v261
      %671 = vmatprep.subr.mxu0 %v266
      %672 = vmatpush1.msra.mxu0 %v265
      %673 = vmatprep.subr.mxu0 %v270
      %674 = vmatpush1.msra.mxu0 %v269
      %675 = vmatprep.subr.mxu0 %v274
      %676 = vmatpush1.msra.mxu0 %v273
      %677 = vmatprep.subr.mxu0 %v278
      %678 = vmatpush1.msra.mxu0 %v277
      %679 = vmatprep.subr.mxu0 %v282
      %680 = vmatpush1.msra.mxu0 %v281
      %681 = vmatprep.subr.mxu0 %v286
      %682 = vmatpush1.msra.mxu0 %v285
      %683 = vmatprep.subr.mxu0 0.0
      %684 = vmatpush1.msra.mxu0 0.0
      %685 = vmatprep.subr.mxu0 0.0
      %686 = vmatpush1.msra.mxu0 0.0
      %687 = vmatprep.subr.mxu0 0.0
      %688 = vmatpush1.msra.mxu0 0.0
      %689 = vmatprep.subr.mxu0 0.0
      %690 = vmatpush1.msra.mxu0 0.0
      %691 = vmatprep.subr.mxu0 0.0
      %692 = vmatpush1.msra.mxu0 0.0
      %693 = vmatprep.subr.mxu0 0.0
      %694 = vmatpush1.msra.mxu0 0.0
      %695 = vmatprep.subr.mxu0 0.0
      %696 = vmatpush1.msra.mxu0 0.0
      %697 = vmatprep.subr.mxu0 0.0
      %698 = vmatpush1.msra.mxu0 0.0
      %699 = vmatprep.subr.mxu0 0.0
      %700 = vmatpush1.msra.mxu0 0.0
      %701 = vmatprep.subr.mxu0 0.0
      %702 = vmatpush1.msra.mxu0 0.0
      %703 = vmatprep.subr.mxu0 0.0
      %704 = vmatpush1.msra.mxu0 0.0
      %705 = vmatprep.subr.mxu0 0.0
      %706 = vmatpush1.msra.mxu0 0.0
      %707 = vmatprep.subr.mxu0 0.0
      %708 = vmatpush1.msra.mxu0 0.0
      %709 = vmatprep.subr.mxu0 0.0
      %710 = vmatpush1.msra.mxu0 0.0
      %711 = vmatprep.subr.mxu0 0.0
      %712 = vmatpush1.msra.mxu0 0.0
      %713 = vmatprep.subr.mxu0 0.0
      %714 = vmatpush1.msra.mxu0 0.0
      %715 = vmatprep.mubr.f32.mxu0 0.0
      %716 = vmatmul.mubr.f32.gmra.mrb[0].mxu0 %v222
      %v717 = vpop.f32.mrb[0].mxu0
      %v718 = vadd.f32 %v576, %v717
      %v719 = vpop.f32.mrb[0].mxu0
      %v720 = vadd.f32 %v578, %v719
      %721 = vdwg.mxu0
      %v722 = vld [vmem:[%s2] sm:$0xff]
      %v723 = vld [vmem:[%s2 + $0x8] sm:$0xff]
      %v724 = vld [vmem:[%s2 + $0x10] sm:$0xff]
      %v725 = vld [vmem:[%s2 + $0x18] sm:$0xff]
      %v726 = vld [vmem:[%s2 + $0x20] sm:$0xff]
      %v727 = vld [vmem:[%s2 + $0x28] sm:$0xff]
      %v728 = vld [vmem:[%s2 + $0x30] sm:$0xff]
      %v729 = vld [vmem:[%s2 + $0x38] sm:$0xff]
      %v730 = vld [vmem:[%s2 + $0x40] sm:$0xff]
      %v731 = vld [vmem:[%s2 + $0x48] sm:$0xff]
      %v732 = vld [vmem:[%s2 + $0x50] sm:$0xff]
      %v733 = vld [vmem:[%s2 + $0x58] sm:$0xff]
      %v734 = vld [vmem:[%s2 + $0x60] sm:$0xff]
      %v735 = vld [vmem:[%s2 + $0x68] sm:$0xff]
      %v736 = vld [vmem:[%s2 + $0x70] sm:$0xff]
      %v737 = vld [vmem:[%s2 + $0x78] sm:$0xff]
      %738 = vmatprep.subr.mxu0 0.0
      %739 = vmatpush1.msra.mxu0 %v722
      %740 = vmatprep.subr.mxu0 0.0
      %741 = vmatpush1.msra.mxu0 %v723
      %742 = vmatprep.subr.mxu0 0.0
      %743 = vmatpush1.msra.mxu0 %v724
      %744 = vmatprep.subr.mxu0 0.0
      %745 = vmatpush1.msra.mxu0 %v725
      %746 = vmatprep.subr.mxu0 0.0
      %747 = vmatpush1.msra.mxu0 %v726
      %748 = vmatprep.subr.mxu0 0.0
      %749 = vmatpush1.msra.mxu0 %v727
      %750 = vmatprep.subr.mxu0 0.0
      %751 = vmatpush1.msra.mxu0 %v728
      %752 = vmatprep.subr.mxu0 0.0
      %753 = vmatpush1.msra.mxu0 %v729
      %754 = vmatprep.subr.mxu0 0.0
      %755 = vmatpush1.msra.mxu0 %v730
      %756 = vmatprep.subr.mxu0 0.0
      %757 = vmatpush1.msra.mxu0 %v731
      %758 = vmatprep.subr.mxu0 0.0
      %759 = vmatpush1.msra.mxu0 %v732
      %760 = vmatprep.subr.mxu0 0.0
      %761 = vmatpush1.msra.mxu0 %v733
      %762 = vmatprep.subr.mxu0 0.0
      %763 = vmatpush1.msra.mxu0 %v734
      %764 = vmatprep.subr.mxu0 0.0
      %765 = vmatpush1.msra.mxu0 %v735
      %766 = vmatprep.subr.mxu0 0.0
      %767 = vmatpush1.msra.mxu0 %v736
      %768 = vmatprep.subr.mxu0 0.0
      %769 = vmatpush1.msra.mxu0 %v737
      %770 = vmatprep.subr.mxu0 0.0
      %771 = vmatpush1.msra.mxu0 0.0
      %772 = vmatprep.subr.mxu0 0.0
      %773 = vmatpush1.msra.mxu0 0.0
      %774 = vmatprep.subr.mxu0 0.0
      %775 = vmatpush1.msra.mxu0 0.0
      %776 = vmatprep.subr.mxu0 0.0
      %777 = vmatpush1.msra.mxu0 0.0
      %778 = vmatprep.subr.mxu0 0.0
      %779 = vmatpush1.msra.mxu0 0.0
      %780 = vmatprep.subr.mxu0 0.0
      %781 = vmatpush1.msra.mxu0 0.0
      %782 = vmatprep.subr.mxu0 0.0
      %783 = vmatpush1.msra.mxu0 0.0
      %784 = vmatprep.subr.mxu0 0.0
      %785 = vmatpush1.msra.mxu0 0.0
      %786 = vmatprep.subr.mxu0 0.0
      %787 = vmatpush1.msra.mxu0 0.0
      %788 = vmatprep.subr.mxu0 0.0
      %789 = vmatpush1.msra.mxu0 0.0
      %790 = vmatprep.subr.mxu0 0.0
      %791 = vmatpush1.msra.mxu0 0.0
      %792 = vmatprep.subr.mxu0 0.0
      %793 = vmatpush1.msra.mxu0 0.0
      %794 = vmatprep.subr.mxu0 0.0
      %795 = vmatpush1.msra.mxu0 0.0
      %796 = vmatprep.subr.mxu0 0.0
      %797 = vmatpush1.msra.mxu0 0.0
      %798 = vmatprep.subr.mxu0 0.0
      %799 = vmatpush1.msra.mxu0 0.0
      %800 = vmatprep.subr.mxu0 0.0
      %801 = vmatpush1.msra.mxu0 0.0
      %802 = vmatprep.mubr.f32.mxu0 0.0
      %803 = vmatmul.mubr.f32.gmra.mrb[0].mxu0 %v370
      %v804 = vpop.f32.mrb[0].mxu0
      %v805 = vadd.f32 0.0, %v804
      %v806 = vpop.f32.mrb[0].mxu0
      %807 = vdwg.mxu0
      %v808 = vsub.f32 %v805, %v222
      %s809 = scalar_lea.vmem %s3, 1024
      %v810 = vld [vmem:[%s809] sm:$0xff]
      %v811 = vld [vmem:[%s809 + $0x8] sm:$0xff]
      %v812 = vld [vmem:[%s809 + $0x10] sm:$0xff]
      %v813 = vld [vmem:[%s809 + $0x18] sm:$0xff]
      %v814 = vld [vmem:[%s809 + $0x20] sm:$0xff]
      %v815 = vld [vmem:[%s809 + $0x28] sm:$0xff]
      %v816 = vld [vmem:[%s809 + $0x30] sm:$0xff]
      %v817 = vld [vmem:[%s809 + $0x38] sm:$0xff]
      %v818 = vld [vmem:[%s809 + $0x40] sm:$0xff]
      %v819 = vld [vmem:[%s809 + $0x48] sm:$0xff]
      %v820 = vld [vmem:[%s809 + $0x50] sm:$0xff]
      %v821 = vld [vmem:[%s809 + $0x58] sm:$0xff]
      %v822 = vld [vmem:[%s809 + $0x60] sm:$0xff]
      %v823 = vld [vmem:[%s809 + $0x68] sm:$0xff]
      %v824 = vld [vmem:[%s809 + $0x70] sm:$0xff]
      %v825 = vld [vmem:[%s809 + $0x78] sm:$0xff]
      %v826 = vld [vmem:[%s809 + $0x80] sm:$0xff]
      %v827 = vld [vmem:[%s809 + $0x88] sm:$0xff]
      %v828 = vld [vmem:[%s809 + $0x90] sm:$0xff]
      %v829 = vld [vmem:[%s809 + $0x98] sm:$0xff]
      %v830 = vld [vmem:[%s809 + $0xa0] sm:$0xff]
      %v831 = vld [vmem:[%s809 + $0xa8] sm:$0xff]
      %v832 = vld [vmem:[%s809 + $0xb0] sm:$0xff]
      %v833 = vld [vmem:[%s809 + $0xb8] sm:$0xff]
      %v834 = vld [vmem:[%s809 + $0xc0] sm:$0xff]
      %v835 = vld [vmem:[%s809 + $0xc8] sm:$0xff]
      %v836 = vld [vmem:[%s809 + $0xd0] sm:$0xff]
      %v837 = vld [vmem:[%s809 + $0xd8] sm:$0xff]
      %v838 = vld [vmem:[%s809 + $0xe0] sm:$0xff]
      %v839 = vld [vmem:[%s809 + $0xe8] sm:$0xff]
      %v840 = vld [vmem:[%s809 + $0xf0] sm:$0xff]
      %v841 = vld [vmem:[%s809 + $0xf8] sm:$0xff]
      %v842 = vld [vmem:[%s809 + $0x100] sm:$0xff]
      %v843 = vld [vmem:[%s809 + $0x108] sm:$0xff]
      %v844 = vld [vmem:[%s809 + $0x110] sm:$0xff]
      %v845 = vld [vmem:[%s809 + $0x118] sm:$0xff]
      %v846 = vld [vmem:[%s809 + $0x120] sm:$0xff]
      %v847 = vld [vmem:[%s809 + $0x128] sm:$0xff]
      %v848 = vld [vmem:[%s809 + $0x130] sm:$0xff]
      %v849 = vld [vmem:[%s809 + $0x138] sm:$0xff]
      %v850 = vld [vmem:[%s809 + $0x140] sm:$0xff]
      %v851 = vld [vmem:[%s809 + $0x148] sm:$0xff]
      %v852 = vld [vmem:[%s809 + $0x150] sm:$0xff]
      %v853 = vld [vmem:[%s809 + $0x158] sm:$0xff]
      %v854 = vld [vmem:[%s809 + $0x160] sm:$0xff]
      %v855 = vld [vmem:[%s809 + $0x168] sm:$0xff]
      %v856 = vld [vmem:[%s809 + $0x170] sm:$0xff]
      %v857 = vld [vmem:[%s809 + $0x178] sm:$0xff]
      %v858 = vld [vmem:[%s809 + $0x180] sm:$0xff]
      %v859 = vld [vmem:[%s809 + $0x188] sm:$0xff]
      %v860 = vld [vmem:[%s809 + $0x190] sm:$0xff]
      %v861 = vld [vmem:[%s809 + $0x198] sm:$0xff]
      %v862 = vld [vmem:[%s809 + $0x1a0] sm:$0xff]
      %v863 = vld [vmem:[%s809 + $0x1a8] sm:$0xff]
      %v864 = vld [vmem:[%s809 + $0x1b0] sm:$0xff]
      %v865 = vld [vmem:[%s809 + $0x1b8] sm:$0xff]
      %v866 = vld [vmem:[%s809 + $0x1c0] sm:$0xff]
      %v867 = vld [vmem:[%s809 + $0x1c8] sm:$0xff]
      %v868 = vld [vmem:[%s809 + $0x1d0] sm:$0xff]
      %v869 = vld [vmem:[%s809 + $0x1d8] sm:$0xff]
      %v870 = vld [vmem:[%s809 + $0x1e0] sm:$0xff]
      %v871 = vld [vmem:[%s809 + $0x1e8] sm:$0xff]
      %v872 = vld [vmem:[%s809 + $0x1f0] sm:$0xff]
      %v873 = vld [vmem:[%s809 + $0x1f8] sm:$0xff]
      %874 = vmatprep.subr.mxu0 %v811
      %875 = vmatpush1.msra.mxu0 %v810
      %876 = vmatprep.subr.mxu0 %v815
      %877 = vmatpush1.msra.mxu0 %v814
      %878 = vmatprep.subr.mxu0 %v819
      %879 = vmatpush1.msra.mxu0 %v818
      %880 = vmatprep.subr.mxu0 %v823
      %881 = vmatpush1.msra.mxu0 %v822
      %882 = vmatprep.subr.mxu0 %v827
      %883 = vmatpush1.msra.mxu0 %v826
      %884 = vmatprep.subr.mxu0 %v831
      %885 = vmatpush1.msra.mxu0 %v830
      %886 = vmatprep.subr.mxu0 %v835
      %887 = vmatpush1.msra.mxu0 %v834
      %888 = vmatprep.subr.mxu0 %v839
      %889 = vmatpush1.msra.mxu0 %v838
      %890 = vmatprep.subr.mxu0 %v843
      %891 = vmatpush1.msra.mxu0 %v842
      %892 = vmatprep.subr.mxu0 %v847
      %893 = vmatpush1.msra.mxu0 %v846
      %894 = vmatprep.subr.mxu0 %v851
      %895 = vmatpush1.msra.mxu0 %v850
      %896 = vmatprep.subr.mxu0 %v855
      %897 = vmatpush1.msra.mxu0 %v854
      %898 = vmatprep.subr.mxu0 %v859
      %899 = vmatpush1.msra.mxu0 %v858
      %900 = vmatprep.subr.mxu0 %v863
      %901 = vmatpush1.msra.mxu0 %v862
      %902 = vmatprep.subr.mxu0 %v867
      %903 = vmatpush1.msra.mxu0 %v866
      %904 = vmatprep.subr.mxu0 %v871
      %905 = vmatpush1.msra.mxu0 %v870
      %906 = vmatprep.subr.mxu0 0.0
      %907 = vmatpush1.msra.mxu0 0.0
      %908 = vmatprep.subr.mxu0 0.0
      %909 = vmatpush1.msra.mxu0 0.0
      %910 = vmatprep.subr.mxu0 0.0
      %911 = vmatpush1.msra.mxu0 0.0
      %912 = vmatprep.subr.mxu0 0.0
      %913 = vmatpush1.msra.mxu0 0.0
      %914 = vmatprep.subr.mxu0 0.0
      %915 = vmatpush1.msra.mxu0 0.0
      %916 = vmatprep.subr.mxu0 0.0
      %917 = vmatpush1.msra.mxu0 0.0
      %918 = vmatprep.subr.mxu0 0.0
      %919 = vmatpush1.msra.mxu0 0.0
      %920 = vmatprep.subr.mxu0 0.0
      %921 = vmatpush1.msra.mxu0 0.0
      %922 = vmatprep.subr.mxu0 0.0
      %923 = vmatpush1.msra.mxu0 0.0
      %924 = vmatprep.subr.mxu0 0.0
      %925 = vmatpush1.msra.mxu0 0.0
      %926 = vmatprep.subr.mxu0 0.0
      %927 = vmatpush1.msra.mxu0 0.0
      %928 = vmatprep.subr.mxu0 0.0
      %929 = vmatpush1.msra.mxu0 0.0
      %930 = vmatprep.subr.mxu0 0.0
      %931 = vmatpush1.msra.mxu0 0.0
      %932 = vmatprep.subr.mxu0 0.0
      %933 = vmatpush1.msra.mxu0 0.0
      %934 = vmatprep.subr.mxu0 0.0
      %935 = vmatpush1.msra.mxu0 0.0
      %936 = vmatprep.subr.mxu0 0.0
      %937 = vmatpush1.msra.mxu0 0.0
      %938 = vmatprep.mubr.f32.mxu0 0.0
      %939 = vmatmul.mubr.f32.gmra.mrb[0].mxu0 %v808
      %v940 = vpop.f32.mrb[0].mxu0
      %v941 = vadd.f32 0.0, %v940
      %v942 = vpop.f32.mrb[0].mxu0
      %v943 = vadd.f32 0.0, %v942
      %944 = vdwg.mxu0
      %945 = vmatprep.subr.mxu0 %v813
      %946 = vmatpush1.msra.mxu0 %v812
      %947 = vmatprep.subr.mxu0 %v817
      %948 = vmatpush1.msra.mxu0 %v816
      %949 = vmatprep.subr.mxu0 %v821
      %950 = vmatpush1.msra.mxu0 %v820
      %951 = vmatprep.subr.mxu0 %v825
      %952 = vmatpush1.msra.mxu0 %v824
      %953 = vmatprep.subr.mxu0 %v829
      %954 = vmatpush1.msra.mxu0 %v828
      %955 = vmatprep.subr.mxu0 %v833
      %956 = vmatpush1.msra.mxu0 %v832
      %957 = vmatprep.subr.mxu0 %v837
      %958 = vmatpush1.msra.mxu0 %v836
      %959 = vmatprep.subr.mxu0 %v841
      %960 = vmatpush1.msra.mxu0 %v840
      %961 = vmatprep.subr.mxu0 %v845
      %962 = vmatpush1.msra.mxu0 %v844
      %963 = vmatprep.subr.mxu0 %v849
      %964 = vmatpush1.msra.mxu0 %v848
      %965 = vmatprep.subr.mxu0 %v853
      %966 = vmatpush1.msra.mxu0 %v852
      %967 = vmatprep.subr.mxu0 %v857
      %968 = vmatpush1.msra.mxu0 %v856
      %969 = vmatprep.subr.mxu0 %v861
      %970 = vmatpush1.msra.mxu0 %v860
      %971 = vmatprep.subr.mxu0 %v865
      %972 = vmatpush1.msra.mxu0 %v864
      %973 = vmatprep.subr.mxu0 %v869
      %974 = vmatpush1.msra.mxu0 %v868
      %975 = vmatprep.subr.mxu0 %v873
      %976 = vmatpush1.msra.mxu0 %v872
      %977 = vmatprep.subr.mxu0 0.0
      %978 = vmatpush1.msra.mxu0 0.0
      %979 = vmatprep.subr.mxu0 0.0
      %980 = vmatpush1.msra.mxu0 0.0
      %981 = vmatprep.subr.mxu0 0.0
      %982 = vmatpush1.msra.mxu0 0.0
      %983 = vmatprep.subr.mxu0 0.0
      %984 = vmatpush1.msra.mxu0 0.0
      %985 = vmatprep.subr.mxu0 0.0
      %986 = vmatpush1.msra.mxu0 0.0
      %987 = vmatprep.subr.mxu0 0.0
      %988 = vmatpush1.msra.mxu0 0.0
      %989 = vmatprep.subr.mxu0 0.0
      %990 = vmatpush1.msra.mxu0 0.0
      %991 = vmatprep.subr.mxu0 0.0
      %992 = vmatpush1.msra.mxu0 0.0
      %993 = vmatprep.subr.mxu0 0.0
      %994 = vmatpush1.msra.mxu0 0.0
      %995 = vmatprep.subr.mxu0 0.0
      %996 = vmatpush1.msra.mxu0 0.0
      %997 = vmatprep.subr.mxu0 0.0
      %998 = vmatpush1.msra.mxu0 0.0
      %999 = vmatprep.subr.mxu0 0.0
      %1000 = vmatpush1.msra.mxu0 0.0
      %1001 = vmatprep.subr.mxu0 0.0
      %1002 = vmatpush1.msra.mxu0 0.0
      %1003 = vmatprep.subr.mxu0 0.0
      %1004 = vmatpush1.msra.mxu0 0.0
      %1005 = vmatprep.subr.mxu0 0.0
      %1006 = vmatpush1.msra.mxu0 0.0
      %1007 = vmatprep.subr.mxu0 0.0
      %1008 = vmatpush1.msra.mxu0 0.0
      %1009 = vmatprep.mubr.f32.mxu0 0.0
      %1010 = vmatmul.mubr.f32.gmra.mrb[0].mxu0 %v808
      %v1011 = vpop.f32.mrb[0].mxu0
      %v1012 = vadd.f32 0.0, %v1011
      %v1013 = vpop.f32.mrb[0].mxu0
      %v1014 = vadd.f32 0.0, %v1013
      %1015 = vdwg.mxu0
      %v1016 = vadd.f32 %v647, %v941
      %v1017 = vadd.f32 %v649, %v943
      %v1018 = vadd.f32 %v718, %v1012
      %v1019 = vadd.f32 %v720, %v1014
      %v1020 = vld [vmem:[%s4] sm:$0xf]
      %v1022 = vlaneseq
      %v1023 = vshrl.u32 %v1022, 7
      %v1024 = vsub.s32 0, %v1023
      %v1025 = vrot.slane %v1020, %v1024
      %v1026 = vlaneseq
      %v1027 = vshrl.u32 %v1026, 7
      %v1028 = vsub.s32 1, %v1027
      %v1029 = vrot.slane %v1020, %v1028
      %v1030 = vlaneseq
      %v1031 = vshrl.u32 %v1030, 7
      %v1032 = vsub.s32 2, %v1031
      %v1033 = vrot.slane %v1020, %v1032
      %v1034 = vlaneseq
      %v1035 = vshrl.u32 %v1034, 7
      %v1036 = vsub.s32 3, %v1035
      %v1037 = vrot.slane %v1020, %v1036
      %v1042 = vadd.f32 %v1016, %v1025
      %v1043 = vadd.f32 %v1017, %v1029
      %v1044 = vadd.f32 %v1018, %v1033
      %v1045 = vadd.f32 %v1019, %v1037
      %1046 = vst [vmem:[%s221] sm:$0xff] %v1042
      %1047 = vst [vmem:[%s221 + $0x8] sm:$0xff] %v1043
      %1048 = vst [vmem:[%s221 + $0x10] sm:$0xff] %v1044
      %1049 = vst [vmem:[%s221 + $0x18] sm:$0xff] %v1045
      %p1050 = scmp.lt.s32.totalorder %s16, 1
      %s1051 = scalar_select %p1050, %s16, 1
      %s1052 = smul.addr %s1051, 4
      %s1053 = smul.addr %s1052, 8
      %s1054 = scalar_lea.vmem %s5, %s1053
      // Predicated region
      $region41: #{cheb_graph_conv.1} parent=39 // pred_check
        %p1055 = pneg %p144
      $region42: #{cheb_graph_conv.1} parent=39 // pred_check_branch
        %1057 = sbr.rel (%p1055) target = $region44
      $region43: #{cheb_graph_conv.1} parent=39 // pred_region
        _
      $region44: #{cheb_graph_conv.1} parent=39 // pred_fallthru
        _
    $region40: #{cheb_graph_conv.1} parent=5 // pred_fallthru
      _
    %p1058 = scmp.le.s32.totalorder 2, %s11
    // Predicated region
    $region45: #{cheb_graph_conv.1} parent=5 // pred_check
      %p1059 = pneg %p1058
    $region46: #{cheb_graph_conv.1} parent=5 // pred_check_branch
      %1061 = sbr.rel (%p1059) target = $region48
    $region47: #{cheb_graph_conv.1} parent=5 // pred_region
      %s1062 = ssub.s32 %s11, 2
      // Predicated region
      $region49: #{cheb_graph_conv.1} parent=47 // pred_check
        %p1063 = pneg %p150
      $region50: #{cheb_graph_conv.1} parent=47 // pred_check_branch
        %1065 = sbr.rel (%p1063) target = $region52
      $region51: #{cheb_graph_conv.1} parent=47 // pred_region
        %p1066 = scmp.lt.s32.totalorder %s17, 1
        %s1067 = scalar_select %p1066, %s17, 1
        %s1068 = smul.addr %s1067, 4
        %s1069 = smul.addr %s1068, 8
        %s1070 = scalar_lea.vmem %s5, %s1069
      $region52: #{cheb_graph_conv.1} parent=47 // pred_fallthru
        _
    $region48: #{cheb_graph_conv.1} parent=5 // pred_fallthru
      _
  $region6: #{cheb_graph_conv.1} parent=0 // loop_footer
    %s15 = sadd.s32 1, %s11
  $region7: #{cheb_graph_conv.1} parent=0 // loop_footer_branch
    %10 = sbr.rel target = $region3
  $region8: #{cheb_graph_conv.1} parent=0 // loop_exit
    _

</llo_original>
